<compile_context>
chip_gen: v5e
topology: v5e:2x2
jax: 0.10.0
libtpu: 0.0.40
codegen_flags: <defaults>
</compile_context>

<pallas_src>
import jax
import jax.numpy as jnp
from jax.experimental import pallas as pl
from jax.experimental.pallas import tpu as pltpu


def _round_up(x: int, m: int) -> int:
    return ((x + m - 1) // m) * m


def _choose_tm(n_rows: int, tm: int) -> int:
    """Pick the row-tile size.

    Tiles must be a multiple of 8 rows (16 keeps bf16 x-tiles sublane-packed)
    unless a tile covers the full row extent; when a single tile would cover
    everything, split into two tiles so ("parallel",) can shard across the two
    v7x TensorCores.
    """
    tm = max(16, (tm // 16) * 16)
    if n_rows > tm:
        return tm
    half = _round_up(pl.cdiv(n_rows, 2), 16)
    return min(tm, max(16, half))


def _linear_relu_kernel(x_ref, w_ref, b_ref, o_ref):
    # x: (TM, c_in) source dtype   w: (c_in, c_out) bf16   b: (1, c_out) f32
    # o: (TM, c_out) out dtype
    x = x_ref[...].astype(w_ref.dtype)            # cast on VPU, hidden under DMA
    h = jnp.dot(x, w_ref[...], preferred_element_type=jnp.float32)
    h = h + b_ref[...]                            # broadcast bias over rows
    o_ref[...] = jnp.maximum(h, 0.0).astype(o_ref.dtype)


def prepare_initial_embedding_params(w, b, compute_dtype=jnp.bfloat16):
    """One-time parameter prep (do NOT call per forward).

    Args:
      w: (c_out, c_in) float32 -- PyTorch nn.Linear weight layout.
      b: (c_out,)      float32
    Returns:
      (w_t, b_2d): weight transposed to (c_in, c_out) in compute_dtype and
      bias reshaped to (1, c_out) float32.  No padding.
    """
    w = jnp.asarray(w, jnp.float32)
    b = jnp.asarray(b, jnp.float32)
    w_t = w.T.astype(compute_dtype)               # (c_in, c_out)
    b_2d = b.reshape(1, -1)                       # (1, c_out) f32
    return w_t, b_2d


def initial_embedding_forward(features, w_t, b_2d, *, tm=1024,
                              out_dtype=jnp.float32, min_pallas_rows=256):
    """relu(features @ W.T + b).

    Args:
      features: (..., c_in) array (any float dtype; cast to bf16 in-kernel).
      w_t, b_2d: output of prepare_initial_embedding_params.
      tm: requested row-tile size.
      out_dtype: output dtype (f32 matches the PyTorch module; bf16 halves the
        dominant HBM write term if the consumer accepts it).
      min_pallas_rows: below this many rows, fall back to plain XLA.
    Returns:
      (..., c_out) array of out_dtype.
    """
    c_in, c_out = w_t.shape
    assert features.shape[-1] == c_in, "c_in mismatch between features and weight"
    lead = features.shape[:-1]
    x2d = features.reshape(-1, c_in)
    B = x2d.shape[0]

    # Small-B fast path: launch + wrapper overhead dwarfs the math; XLA fuses it.
    if B < min_pallas_rows:
        h = jnp.dot(x2d.astype(w_t.dtype), w_t, preferred_element_type=jnp.float32)
        return jnp.maximum(h + b_2d, 0.0).astype(out_dtype).reshape(*lead, c_out)

    TM = _choose_tm(B, tm)
    grid = (pl.cdiv(B, TM),)

    x_item = jnp.dtype(x2d.dtype).itemsize
    o_item = jnp.dtype(out_dtype).itemsize
    w_item = jnp.dtype(w_t.dtype).itemsize

    flops = 2 * B * c_in * c_out
    bytes_accessed = (B * c_in * x_item          # x read (no pad, single pass)
                      + c_in * c_out * w_item    # resident weight
                      + c_out * 4                # bias
                      + B * c_out * o_item)      # output write

    # Double-buffered x/out tiles + (compiler-)double-buffered resident W/bias.
    vmem_need = (2 * (TM * c_in * x_item + TM * c_out * o_item)
                 + 2 * (c_in * c_out * w_item + c_out * 4))
    vmem_limit = int(min(max(4 * vmem_need, 16 * 1024 * 1024), 64 * 1024 * 1024))

    out = pl.pallas_call(
        _linear_relu_kernel,
        out_shape=jax.ShapeDtypeStruct((B, c_out), out_dtype),
        grid_spec=pltpu.PrefetchScalarGridSpec(
            num_scalar_prefetch=0,
            grid=grid,
            in_specs=[
                # x: tiled over rows; last dim = full c_in (exempt from 128 rule).
                pl.BlockSpec((TM, c_in), lambda i: (i, 0)),
                # W: full-extent block, VMEM-resident across all row tiles.
                pl.BlockSpec((c_in, c_out), lambda i: (0, 0)),
                # bias: full-extent block, VMEM-resident.
                pl.BlockSpec((1, c_out), lambda i: (0, 0)),
            ],
            out_specs=pl.BlockSpec((TM, c_out), lambda i: (i, 0)),
        ),
        compiler_params=pltpu.CompilerParams(
            dimension_semantics=("parallel",),
            vmem_limit_bytes=vmem_limit),
        cost_estimate=pl.CostEstimate(flops=flops, transcendentals=0,
                                      bytes_accessed=bytes_accessed),
    )(x2d, w_t, b_2d)

    return out.reshape(*lead, c_out)


def initial_embedding_reference(features, w, b):
    # f32 reference with the same bf16 input/weight rounding, f32 accumulation.
    xq = features.astype(jnp.bfloat16).astype(jnp.float32)
    wq = w.astype(jnp.bfloat16).astype(jnp.float32)
    return jnp.maximum(xq @ wq.T + b, 0.0)


if __name__ == "__main__":
    # GNN initial embedding: c_in=32 features, c_out=64 hidden.
    # Use 500 nodes so the Pallas path runs (>= min_pallas_rows) and the row
    # grid has a ragged last tile (500 = 256 + 244), exercising the masking.
    B, c_in, c_out = 500, 32, 64

    key = jax.random.PRNGKey(0)
    kx, kw, kb = jax.random.split(key, 3)

    x = jax.random.normal(kx, (B, c_in), dtype=jnp.float32)

    # PyTorch-style uniform(-1/sqrt(fan_in), +1/sqrt(fan_in)) init.
    bound = 1.0 / jnp.sqrt(jnp.float32(c_in))
    w = jax.random.uniform(kw, (c_out, c_in), jnp.float32, -bound, bound)
    b = jax.random.uniform(kb, (c_out,), jnp.float32, -bound, bound)

    # One-time param prep (transpose / cast hoisted out of the hot path).
    w_t, b_2d = prepare_initial_embedding_params(w, b)

    # Pallas path (B >= min_pallas_rows).
    out = initial_embedding_forward(x, w_t, b_2d)
    jax.block_until_ready(out)

    ref_bf16 = initial_embedding_reference(x, w, b)
    ref_f32 = jnp.maximum(x @ w.T + b, 0.0)

    assert out.shape == (B, c_out)
    assert jnp.allclose(out, ref_bf16, atol=1e-4, rtol=1e-4), "mismatch vs bf16 reference"
    assert jnp.allclose(out, ref_f32, atol=5e-2, rtol=5e-2), "mismatch vs f32 reference"

    # Small-B fast path (XLA fallback) at the module's nominal tiny batch.
    x_small = x[:8]
    out_small = initial_embedding_forward(x_small, w_t, b_2d)
    jax.block_until_ready(out_small)
    assert out_small.shape == (8, c_out)
    assert jnp.allclose(out_small, ref_bf16[:8], atol=1e-4, rtol=1e-4), \
        "mismatch on small-batch fast path"

    print("KERNEL_OK")
</pallas_src>

<mosaic_0001>
module attributes {stable_mosaic.version = 11 : i64} {
  func.func @_linear_relu_kernel(%arg0: i32, %arg1: memref<256x32xf32, #tpu.memory_space<vmem>>, %arg2: memref<32x64xbf16, #tpu.memory_space<vmem>>, %arg3: memref<1x64xf32, #tpu.memory_space<vmem>>, %arg4: memref<256x64xf32, #tpu.memory_space<vmem>>) attributes {dimension_semantics = [#tpu.dimension_semantics<parallel>], iteration_bounds = array<i64: 2>, scalar_prefetch = 0 : i64, scratch_operands = 0 : i64, tpu.core_type = #tpu.core_type<tc>, window_params = [{transform_indices = @transform_0, window_bounds = array<i64: 256, 32>}, {pipeline_mode = #tpu.pipeline_mode<synchronous>, transform_indices = @transform_1, window_bounds = array<i64: 32, 64>}, {pipeline_mode = #tpu.pipeline_mode<synchronous>, transform_indices = @transform_2, window_bounds = array<i64: 1, 64>}, {transform_indices = @transform_3, window_bounds = array<i64: 256, 64>}]} {
    %c0 = arith.constant 0 : index
    %c0_0 = arith.constant 0 : index
    %0 = vector.load %arg1[%c0, %c0_0] : memref<256x32xf32, #tpu.memory_space<vmem>>, vector<256x32xf32>
    %1 = arith.truncf %0 : vector<256x32xf32> to vector<256x32xbf16>
    %c0_1 = arith.constant 0 : index
    %c0_2 = arith.constant 0 : index
    %2 = vector.load %arg2[%c0_1, %c0_2] : memref<32x64xbf16, #tpu.memory_space<vmem>>, vector<32x64xbf16>
    %cst = arith.constant dense<0.000000e+00> : vector<256x64xf32>
    %3 = tpu.matmul %1, %2, %cst {dimension_numbers = #tpu.dot_dimension_numbers<[1], [0], [0], [1], [0, 0, 1, 1], [], []>} : vector<256x32xbf16>, vector<32x64xbf16>, vector<256x64xf32> -> vector<256x64xf32>
    %c0_3 = arith.constant 0 : index
    %c0_4 = arith.constant 0 : index
    %4 = vector.load %arg3[%c0_3, %c0_4] : memref<1x64xf32, #tpu.memory_space<vmem>>, vector<1x64xf32>
    %5 = vector.broadcast %4 : vector<1x64xf32> to vector<256x64xf32>
    %6 = arith.addf %3, %5 : vector<256x64xf32>
    %cst_5 = arith.constant 0.000000e+00 : f32
    %7 = vector.broadcast %cst_5 : f32 to vector<256x64xf32>
    %8 = arith.maximumf %6, %7 : vector<256x64xf32>
    %c0_6 = arith.constant 0 : index
    %c0_7 = arith.constant 0 : index
    %9 = vector.load %arg4[%c0_6, %c0_7] : memref<256x64xf32, #tpu.memory_space<vmem>>, vector<256x64xf32>
    tpu.vector_store %arg4[%c0_6, %c0_7], %8 {strides = array<i32>} : memref<256x64xf32, #tpu.memory_space<vmem>>, vector<256x64xf32>,
    return
  }
  func.func @transform_0(%arg0: i32) -> (i32, i32) {
    %c0_i32 = arith.constant 0 : i32
    %c0_i32_0 = arith.constant 0 : i32
    return %arg0, %c0_i32 : i32, i32
  }
  func.func @transform_1(%arg0: i32) -> (i32, i32) {
    %c0_i32 = arith.constant 0 : i32
    %c0_i32_0 = arith.constant 0 : i32
    %c0_i32_1 = arith.constant 0 : i32
    return %c0_i32, %c0_i32_0 : i32, i32
  }
  func.func @transform_2(%arg0: i32) -> (i32, i32) {
    %c0_i32 = arith.constant 0 : i32
    %c0_i32_0 = arith.constant 0 : i32
    %c0_i32_1 = arith.constant 0 : i32
    return %c0_i32, %c0_i32_0 : i32, i32
  }
  func.func @transform_3(%arg0: i32) -> (i32, i32) {
    %c0_i32 = arith.constant 0 : i32
    %c0_i32_0 = arith.constant 0 : i32
    return %arg0, %c0_i32 : i32, i32
  }
}

</mosaic_0001>

<llo_original>
// kernel: tpu_custom_call.1
$region0: #{tpu_custom_call.1}
  #allocation0 [shape = 'u32[]', space=smem, size = 0x4, offset = 0x4, fixed_abs, tag = 'smem constant byte address 0x4 - core index']
  #allocation1 [shape = 'u32[72,128]{1,0:T(1,128)}', space=vmem, size = 0x9000, scoped, tag = 'internal scratch']
  %s0 = inlined_call_operand.vmem [shape: f32[500,32], index: 0, kind: input, shape index: {}]
  %s1 = inlined_call_operand.vmem [shape: bf16[32,64], index: 1, kind: input, shape index: {}]
  %s2 = inlined_call_operand.vmem [shape: f32[1,64], index: 2, kind: input, shape index: {}]
  %s3 = inlined_call_operand.vmem [shape: f32[500,64], index: 3, kind: output, shape index: {}]
  %s4 = sld [smem:[#allocation0]]
  $region93: #{tpu_custom_call.1} parent=0
    _
  %s6 = ssub.s32 1, %s4
  %s7 = scalar_select 0, %s6, %s4
  $region1: #{tpu_custom_call.1} parent=0
    #allocation2 [shape = 'u8[262144]{0}', space=vmem, size = 0x40000, scoped, tag = 'output window, operand 0']
    loop: start=0, step=1, limit=4
    $region2: #{tpu_custom_call.1} parent=1 // loop_pre_header
      _
    $region3: #{tpu_custom_call.1} parent=1 // loop_header
      %s9 = sphi 0, %s13
      %p10 = scmp.ge.s32.totalorder %s9, 4
      %s19 = sphi 0, %s21
      %s22 = sphi 0, %s19
      %s23 = sphi 0, %s22
      %s39 = sphi 0, %s23
      %s43 = sphi 0, %s43
      %s45 = sphi 0, %s43
      %s46 = sphi 0, %s45
      %s60 = sphi 0, %s46
      %s64 = sphi 0, %s64
      %s66 = sphi 0, %s64
      %s67 = sphi 0, %s66
      %s81 = sphi 0, %s67
      %s87 = sphi 0, %s89
      %s90 = sphi 0, %s87
      %s91 = sphi 0, %s90
      %s107 = sphi 0, %s91
    $region4: #{tpu_custom_call.1} parent=1 // loop_header_branch
      %12 = sbr.rel (%p10) target = $region8
    $region5: #{tpu_custom_call.1} parent=1 // loop_body
      %s14 = ssub.s32 %s9, 1
      %s15 = ssub.s32 %s9, 2
      %s16 = sadd.s32 %s9, 1
      %s17 = ssub.s32 %s9, %s16
      %p18 = scmp.eq.s32.totalorder %s17, 0
      %s20 = sadd.s32 %s19, 1
      %s21 = scalar_select %p18, %s19, %s20
      %p24 = pneg %p18
      %p25 = scmp.eq.s32.totalorder %s9, 1
      %p26 = por %p24, %p25
      %p27 = scmp.ne.s32.totalorder %s19, %s22
      %p28 = scmp.eq.s32.totalorder %s9, 0
      %p29 = por %p27, %p28
      %p30 = scmp.ne.s32.totalorder %s19, %s22
      %p31 = scmp.eq.s32.totalorder %s14, 1
      %p32 = por %p30, %p31
      %p33 = scmp.ne.s32.totalorder %s22, %s23
      %p34 = scmp.eq.s32.totalorder %s14, 0
      %p35 = por %p33, %p34
      %p36 = scmp.ne.s32.totalorder %s22, %s23
      %p37 = scmp.eq.s32.totalorder %s15, 1
      %p38 = por %p36, %p37
      %p40 = scmp.ne.s32.totalorder %s23, %s39
      %p41 = scmp.eq.s32.totalorder %s15, 0
      %p42 = por %p40, %p41
      %s44 = sadd.s32 %s43, 1
      %p47 = scmp.eq.s32.totalorder %s9, 1
      %p48 = scmp.ne.s32.totalorder %s43, %s45
      %p49 = scmp.eq.s32.totalorder %s9, 0
      %p50 = por %p48, %p49
      %p51 = scmp.ne.s32.totalorder %s43, %s45
      %p52 = scmp.eq.s32.totalorder %s14, 1
      %p53 = por %p51, %p52
      %p54 = scmp.ne.s32.totalorder %s45, %s46
      %p55 = scmp.eq.s32.totalorder %s14, 0
      %p56 = por %p54, %p55
      %p57 = scmp.ne.s32.totalorder %s45, %s46
      %p58 = scmp.eq.s32.totalorder %s15, 1
      %p59 = por %p57, %p58
      %p61 = scmp.ne.s32.totalorder %s46, %s60
      %p62 = scmp.eq.s32.totalorder %s15, 0
      %p63 = por %p61, %p62
      %s65 = sadd.s32 %s64, 1
      %p68 = scmp.eq.s32.totalorder %s9, 1
      %p69 = scmp.ne.s32.totalorder %s64, %s66
      %p70 = scmp.eq.s32.totalorder %s9, 0
      %p71 = por %p69, %p70
      %p72 = scmp.ne.s32.totalorder %s64, %s66
      %p73 = scmp.eq.s32.totalorder %s14, 1
      %p74 = por %p72, %p73
      %p75 = scmp.ne.s32.totalorder %s66, %s67
      %p76 = scmp.eq.s32.totalorder %s14, 0
      %p77 = por %p75, %p76
      %p78 = scmp.ne.s32.totalorder %s66, %s67
      %p79 = scmp.eq.s32.totalorder %s15, 1
      %p80 = por %p78, %p79
      %p82 = scmp.ne.s32.totalorder %s67, %s81
      %p83 = scmp.eq.s32.totalorder %s15, 0
      %p84 = por %p82, %p83
      %s85 = ssub.s32 %s9, %s16
      %p86 = scmp.eq.s32.totalorder %s85, 0
      %s88 = sadd.s32 %s87, 1
      %s89 = scalar_select %p86, %s87, %s88
      %p92 = pneg %p86
      %p93 = scmp.eq.s32.totalorder %s9, 1
      %p94 = por %p92, %p93
      %p95 = scmp.ne.s32.totalorder %s87, %s90
      %p96 = scmp.eq.s32.totalorder %s9, 0
      %p97 = por %p95, %p96
      %p98 = scmp.ne.s32.totalorder %s87, %s90
      %p99 = scmp.eq.s32.totalorder %s14, 1
      %p100 = por %p98, %p99
      %p101 = scmp.ne.s32.totalorder %s90, %s91
      %p102 = scmp.eq.s32.totalorder %s14, 0
      %p103 = por %p101, %p102
      %p104 = scmp.ne.s32.totalorder %s90, %s91
      %p105 = scmp.eq.s32.totalorder %s15, 1
      %p106 = por %p104, %p105
      %p108 = scmp.ne.s32.totalorder %s91, %s107
      %p109 = scmp.eq.s32.totalorder %s15, 0
      %p110 = por %p108, %p109
      %p111 = scmp.le.s32.totalorder 1, %s9
      %p112 = scmp.lt.s32.totalorder %s9, 3
      %p113 = pnand %p111, %p112
      %p114 = pneg %p113
      // Predicated region
      $region9: #{tpu_custom_call.1} parent=5 // pred_check
        _
      $region10: #{tpu_custom_call.1} parent=5 // pred_check_branch
        %116 = sbr.rel (%p113) target = $region12
      $region11: #{tpu_custom_call.1} parent=5 // pred_region
        %s117 = ssub.s32 %s9, 1
        // Predicated region
        $region13: #{tpu_custom_call.1} parent=11 // pred_check
          %p118 = pneg %p56
        $region14: #{tpu_custom_call.1} parent=11 // pred_check_branch
          %120 = sbr.rel (%p118) target = $region16
        $region15: #{tpu_custom_call.1} parent=11 // pred_region
          _
        $region16: #{tpu_custom_call.1} parent=11 // pred_fallthru
          _
        // Predicated region
        $region17: #{tpu_custom_call.1} parent=11 // pred_check
          %p121 = pneg %p77
        $region18: #{tpu_custom_call.1} parent=11 // pred_check_branch
          %123 = sbr.rel (%p121) target = $region20
        $region19: #{tpu_custom_call.1} parent=11 // pred_region
          _
        $region20: #{tpu_custom_call.1} parent=11 // pred_fallthru
          _
      $region12: #{tpu_custom_call.1} parent=5 // pred_fallthru
        _
      %p124 = scmp.lt.s32.totalorder %s9, 2
      // Predicated region
      $region21: #{tpu_custom_call.1} parent=5 // pred_check
        %p125 = pneg %p124
      $region22: #{tpu_custom_call.1} parent=5 // pred_check_branch
        %127 = sbr.rel (%p125) target = $region24
      $region23: #{tpu_custom_call.1} parent=5 // pred_region
        // Predicated region
        $region25: #{tpu_custom_call.1} parent=23 // pred_check
          %p128 = pneg %p29
        $region26: #{tpu_custom_call.1} parent=23 // pred_check_branch
          %130 = sbr.rel (%p128) target = $region28
        $region27: #{tpu_custom_call.1} parent=23 // pred_region
          %s131 = smul.u32 32, %s9
          %s132 = ssub.s32 63, %s131
          %p133 = scmp.lt.s32.totalorder %s132, 32
          %s134 = scalar_select %p133, %s132, 32
          %s135 = smul.u32 8, %s134
          %p136 = scmp.lt.s32.totalorder %s131, 62
          %s137 = scalar_select %p136, %s131, 62
          %s138 = smul.addr %s137, 8
          %s139 = scalar_lea.vmem %s0, %s138
          %s140 = smul.u32 32, %s9
          %s141 = ssub.s32 63, %s140
          %p142 = scmp.lt.s32.totalorder %s141, 32
          %s143 = scalar_select %p142, %s141, 32
          %s144 = smul.u32 8, %s143
        $region28: #{tpu_custom_call.1} parent=23 // pred_fallthru
          _
      $region24: #{tpu_custom_call.1} parent=5 // pred_fallthru
        _
      %p145 = scmp.le.s32.totalorder 1, %s9
      %p146 = scmp.lt.s32.totalorder %s9, 3
      %p147 = pnand %p145, %p146
      %p148 = pneg %p147
      // Predicated region
      $region29: #{tpu_custom_call.1} parent=5 // pred_check
        _
      $region30: #{tpu_custom_call.1} parent=5 // pred_check_branch
        %150 = sbr.rel (%p147) target = $region32
      $region31: #{tpu_custom_call.1} parent=5 // pred_region
        %s151 = ssub.s32 %s9, 1
        %s152 = smul.u32 32, %s14
        %s153 = ssub.s32 63, %s152
        %p154 = scmp.lt.s32.totalorder %s153, 32
        %s155 = scalar_select %p154, %s153, 32
        %s156 = smul.u32 8, %s155
        %p157 = scmp.lt.s32.totalorder %s152, 62
        %s158 = scalar_select %p157, %s152, 62
        %s159 = smul.addr %s158, 8
        %s160 = scalar_lea.vmem %s0, %s159
        %p161 = pneg %p35
        %p162 = pneg %p32
        %p163 = pneg %p56
        %p164 = pneg %p53
        %p165 = pneg %p77
        %p166 = pneg %p74
        %p167 = pneg %p103
        %p168 = pneg %p100
        %s169 = sand.u32 %s90, 1
        %s170 = sand.u32 %s90, 1
        %s171 = smul.addr %s170, 256
        %s172 = scalar_lea.vmem [#allocation2], %s171
        %s173 = smul.u32 32, %s14
        %s174 = ssub.s32 63, %s173
        %p175 = scmp.lt.s32.totalorder %s174, 32
        %s176 = scalar_select %p175, %s174, 32
        %s177 = smul.u32 8, %s176
        %p178 = scmp.lt.s32.totalorder %s173, 62
        %s179 = scalar_select %p178, %s173, 62
        %s180 = smul.addr %s179, 8
        %s181 = scalar_lea.vmem %s0, %s180
        %s182 = smul.u32 32, %s14
        %s183 = ssub.s32 63, %s182
        %p184 = scmp.lt.s32.totalorder %s183, 32
        %s185 = scalar_select %p184, %s183, 32
        %s186 = smul.u32 8, %s185
        %s187 = smul.u32 32, %s14
        %s188 = ssub.s32 63, %s187
        %p189 = scmp.lt.s32.totalorder %s188, 32
        %s190 = scalar_select %p189, %s188, 32
        %s191 = smul.u32 8, %s190
        %v193 = vld [vmem:[%s181] sm:$0xff]
        %v194 = vld [vmem:[%s181 + $0x8] sm:$0xff]
        %v195 = vld [vmem:[%s181 + $0x10] sm:$0xff]
        %v196 = vld [vmem:[%s181 + $0x18] sm:$0xff]
        %v197 = vld [vmem:[%s181 + $0x20] sm:$0xff]
        %v198 = vld [vmem:[%s181 + $0x28] sm:$0xff]
        %v199 = vld [vmem:[%s181 + $0x30] sm:$0xff]
        %v200 = vld [vmem:[%s181 + $0x38] sm:$0xff]
        %v201 = vld [vmem:[%s181 + $0x40] sm:$0xff]
        %v202 = vld [vmem:[%s181 + $0x48] sm:$0xff]
        %v203 = vld [vmem:[%s181 + $0x50] sm:$0xff]
        %v204 = vld [vmem:[%s181 + $0x58] sm:$0xff]
        %v205 = vld [vmem:[%s181 + $0x60] sm:$0xff]
        %v206 = vld [vmem:[%s181 + $0x68] sm:$0xff]
        %v207 = vld [vmem:[%s181 + $0x70] sm:$0xff]
        %v208 = vld [vmem:[%s181 + $0x78] sm:$0xff]
        %v209 = vld [vmem:[%s181 + $0x80] sm:$0xff]
        %v210 = vld [vmem:[%s181 + $0x88] sm:$0xff]
        %v211 = vld [vmem:[%s181 + $0x90] sm:$0xff]
        %v212 = vld [vmem:[%s181 + $0x98] sm:$0xff]
        %v213 = vld [vmem:[%s181 + $0xa0] sm:$0xff]
        %v214 = vld [vmem:[%s181 + $0xa8] sm:$0xff]
        %v215 = vld [vmem:[%s181 + $0xb0] sm:$0xff]
        %v216 = vld [vmem:[%s181 + $0xb8] sm:$0xff]
        %v217 = vld [vmem:[%s181 + $0xc0] sm:$0xff]
        %v218 = vld [vmem:[%s181 + $0xc8] sm:$0xff]
        %v219 = vld [vmem:[%s181 + $0xd0] sm:$0xff]
        %v220 = vld [vmem:[%s181 + $0xd8] sm:$0xff]
        %v221 = vld [vmem:[%s181 + $0xe0] sm:$0xff]
        %v222 = vld [vmem:[%s181 + $0xe8] sm:$0xff]
        %v223 = vld [vmem:[%s181 + $0xf0] sm:$0xff]
        %v224 = vld [vmem:[%s181 + $0xf8] sm:$0xff]
        %v225 = vpack.c.bf16 %v194, %v193
        %v226 = vpack.c.bf16 %v196, %v195
        %v227 = vpack.c.bf16 %v198, %v197
        %v228 = vpack.c.bf16 %v200, %v199
        %v229 = vpack.c.bf16 %v202, %v201
        %v230 = vpack.c.bf16 %v204, %v203
        %v231 = vpack.c.bf16 %v206, %v205
        %v232 = vpack.c.bf16 %v208, %v207
        %v233 = vpack.c.bf16 %v210, %v209
        %v234 = vpack.c.bf16 %v212, %v211
        %v235 = vpack.c.bf16 %v214, %v213
        %v236 = vpack.c.bf16 %v216, %v215
        %v237 = vpack.c.bf16 %v218, %v217
        %v238 = vpack.c.bf16 %v220, %v219
        %v239 = vpack.c.bf16 %v222, %v221
        %v240 = vpack.c.bf16 %v224, %v223
        %v241 = vld [vmem:[%s1] sm:$0xf]
        %v242 = vld [vmem:[%s1 + $0x4] sm:$0xf]
        %v243 = vld [vmem:[%s1 + $0x8] sm:$0xf]
        %v244 = vld [vmem:[%s1 + $0xc] sm:$0xf]
        %v245 = vld [vmem:[%s2] sm:$0x1]
        %v247 = vperm.slane %v245, 0
        %v253 = vunpack.c.l.b16 %v241
        %v254 = vunpack.c.l.b16 %v242
        %v255 = vunpack.c.l.b16 %v243
        %v256 = vunpack.c.l.b16 %v244
        %v257 = vpack.c.b16 %v254, %v253
        %v258 = vpack.c.b16 %v256, %v255
        %vm261 = vcmask 261120
        %v263 = vsel %vm261, %v225, 0
        %v266 = vsel %vm261, %v226, 0
        %v269 = vsel %vm261, %v227, 0
        %v272 = vsel %vm261, %v228, 0
        %v275 = vsel %vm261, %v229, 0
        %v278 = vsel %vm261, %v230, 0
        %v281 = vsel %vm261, %v231, 0
        %v284 = vsel %vm261, %v232, 0
        %v287 = vsel %vm261, %v233, 0
        %v290 = vsel %vm261, %v234, 0
        %v293 = vsel %vm261, %v235, 0
        %v296 = vsel %vm261, %v236, 0
        %v299 = vsel %vm261, %v237, 0
        %v302 = vsel %vm261, %v238, 0
        %v305 = vsel %vm261, %v239, 0
        %v308 = vsel %vm261, %v240, 0
        %310 = vmatpush.bf16.msra.mxu0 0
        %311 = vmatpush.bf16.msra.mxu0 0
        %312 = vmatpush.bf16.msra.mxu0 0
        %313 = vmatpush.bf16.msra.mxu0 0
        %314 = vmatpush.bf16.msra.mxu0 0
        %315 = vmatpush.bf16.msra.mxu0 0
        %316 = vmatpush.bf16.msra.mxu0 %v258
        %317 = vmatpush.bf16.msra.mxu0 %v257
        %318 = vmatmul.bf16.gmra.mxu0 %v263
        %v319 = vpop.f32.mrf.mxu0
        %v320 = vadd.f32 %v247, %v319
        %v321 = vpop.f32.mrf.mxu0
        %v322 = vadd.f32 %v247, %v321
        %323 = vmatmul.bf16.gmra.mxu0 %v266
        %v324 = vpop.f32.mrf.mxu0
        %v325 = vadd.f32 %v247, %v324
        %v326 = vpop.f32.mrf.mxu0
        %v327 = vadd.f32 %v247, %v326
        %328 = vmatmul.bf16.gmra.mxu0 %v269
        %v329 = vpop.f32.mrf.mxu0
        %v330 = vadd.f32 %v247, %v329
        %v331 = vpop.f32.mrf.mxu0
        %v332 = vadd.f32 %v247, %v331
        %333 = vmatmul.bf16.gmra.mxu0 %v272
        %v334 = vpop.f32.mrf.mxu0
        %v335 = vadd.f32 %v247, %v334
        %v336 = vpop.f32.mrf.mxu0
        %v337 = vadd.f32 %v247, %v336
        %338 = vmatmul.bf16.gmra.mxu0 %v275
        %v339 = vpop.f32.mrf.mxu0
        %v340 = vadd.f32 %v247, %v339
        %v341 = vpop.f32.mrf.mxu0
        %v342 = vadd.f32 %v247, %v341
        %343 = vmatmul.bf16.gmra.mxu0 %v278
        %v344 = vpop.f32.mrf.mxu0
        %v345 = vadd.f32 %v247, %v344
        %v346 = vpop.f32.mrf.mxu0
        %v347 = vadd.f32 %v247, %v346
        %348 = vmatmul.bf16.gmra.mxu0 %v281
        %v349 = vpop.f32.mrf.mxu0
        %v350 = vadd.f32 %v247, %v349
        %v351 = vpop.f32.mrf.mxu0
        %v352 = vadd.f32 %v247, %v351
        %353 = vmatmul.bf16.gmra.mxu0 %v284
        %v354 = vpop.f32.mrf.mxu0
        %v355 = vadd.f32 %v247, %v354
        %v356 = vpop.f32.mrf.mxu0
        %v357 = vadd.f32 %v247, %v356
        %358 = vmatmul.bf16.gmra.mxu0 %v287
        %v359 = vpop.f32.mrf.mxu0
        %v360 = vadd.f32 %v247, %v359
        %v361 = vpop.f32.mrf.mxu0
        %v362 = vadd.f32 %v247, %v361
        %363 = vmatmul.bf16.gmra.mxu0 %v290
        %v364 = vpop.f32.mrf.mxu0
        %v365 = vadd.f32 %v247, %v364
        %v366 = vpop.f32.mrf.mxu0
        %v367 = vadd.f32 %v247, %v366
        %368 = vmatmul.bf16.gmra.mxu0 %v293
        %v369 = vpop.f32.mrf.mxu0
        %v370 = vadd.f32 %v247, %v369
        %v371 = vpop.f32.mrf.mxu0
        %v372 = vadd.f32 %v247, %v371
        %373 = vmatmul.bf16.gmra.mxu0 %v296
        %v374 = vpop.f32.mrf.mxu0
        %v375 = vadd.f32 %v247, %v374
        %v376 = vpop.f32.mrf.mxu0
        %v377 = vadd.f32 %v247, %v376
        %378 = vmatmul.bf16.gmra.mxu0 %v299
        %v379 = vpop.f32.mrf.mxu0
        %v380 = vadd.f32 %v247, %v379
        %v381 = vpop.f32.mrf.mxu0
        %v382 = vadd.f32 %v247, %v381
        %383 = vmatmul.bf16.gmra.mxu0 %v302
        %v384 = vpop.f32.mrf.mxu0
        %v385 = vadd.f32 %v247, %v384
        %v386 = vpop.f32.mrf.mxu0
        %v387 = vadd.f32 %v247, %v386
        %388 = vmatmul.bf16.gmra.mxu0 %v305
        %v389 = vpop.f32.mrf.mxu0
        %v390 = vadd.f32 %v247, %v389
        %v391 = vpop.f32.mrf.mxu0
        %v392 = vadd.f32 %v247, %v391
        %393 = vmatmul.bf16.gmra.mxu0 %v308
        %v394 = vpop.f32.mrf.mxu0
        %v395 = vadd.f32 %v247, %v394
        %v396 = vpop.f32.mrf.mxu0
        %v397 = vadd.f32 %v247, %v396
        %398 = vdwg.mxu0
        %v399 = vmax.f32 %v320, 0.0
        %v400 = vmax.f32 %v322, 0.0
        %v401 = vmax.f32 %v325, 0.0
        %v402 = vmax.f32 %v327, 0.0
        %v403 = vmax.f32 %v330, 0.0
        %v404 = vmax.f32 %v332, 0.0
        %v405 = vmax.f32 %v335, 0.0
        %v406 = vmax.f32 %v337, 0.0
        %v407 = vmax.f32 %v340, 0.0
        %v408 = vmax.f32 %v342, 0.0
        %v409 = vmax.f32 %v345, 0.0
        %v410 = vmax.f32 %v347, 0.0
        %v411 = vmax.f32 %v350, 0.0
        %v412 = vmax.f32 %v352, 0.0
        %v413 = vmax.f32 %v355, 0.0
        %v414 = vmax.f32 %v357, 0.0
        %v415 = vmax.f32 %v360, 0.0
        %v416 = vmax.f32 %v362, 0.0
        %v417 = vmax.f32 %v365, 0.0
        %v418 = vmax.f32 %v367, 0.0
        %v419 = vmax.f32 %v370, 0.0
        %v420 = vmax.f32 %v372, 0.0
        %v421 = vmax.f32 %v375, 0.0
        %v422 = vmax.f32 %v377, 0.0
        %v423 = vmax.f32 %v380, 0.0
        %v424 = vmax.f32 %v382, 0.0
        %v425 = vmax.f32 %v385, 0.0
        %v426 = vmax.f32 %v387, 0.0
        %v427 = vmax.f32 %v390, 0.0
        %v428 = vmax.f32 %v392, 0.0
        %v429 = vmax.f32 %v395, 0.0
        %v430 = vmax.f32 %v397, 0.0
        %vm431 = vcmask 523264
        %432 = vst.msk [vmem:[%s172] sm:$0xff] %vm431, %v399
        %433 = vst.msk [vmem:[%s172 + $0x8] sm:$0xff] %vm431, %v400
        %434 = vst.msk [vmem:[%s172 + $0x10] sm:$0xff] %vm431, %v401
        %435 = vst.msk [vmem:[%s172 + $0x18] sm:$0xff] %vm431, %v402
        %436 = vst.msk [vmem:[%s172 + $0x20] sm:$0xff] %vm431, %v403
        %437 = vst.msk [vmem:[%s172 + $0x28] sm:$0xff] %vm431, %v404
        %438 = vst.msk [vmem:[%s172 + $0x30] sm:$0xff] %vm431, %v405
        %439 = vst.msk [vmem:[%s172 + $0x38] sm:$0xff] %vm431, %v406
        %440 = vst.msk [vmem:[%s172 + $0x40] sm:$0xff] %vm431, %v407
        %441 = vst.msk [vmem:[%s172 + $0x48] sm:$0xff] %vm431, %v408
        %442 = vst.msk [vmem:[%s172 + $0x50] sm:$0xff] %vm431, %v409
        %443 = vst.msk [vmem:[%s172 + $0x58] sm:$0xff] %vm431, %v410
        %444 = vst.msk [vmem:[%s172 + $0x60] sm:$0xff] %vm431, %v411
        %445 = vst.msk [vmem:[%s172 + $0x68] sm:$0xff] %vm431, %v412
        %446 = vst.msk [vmem:[%s172 + $0x70] sm:$0xff] %vm431, %v413
        %447 = vst.msk [vmem:[%s172 + $0x78] sm:$0xff] %vm431, %v414
        %448 = vst.msk [vmem:[%s172 + $0x80] sm:$0xff] %vm431, %v415
        %449 = vst.msk [vmem:[%s172 + $0x88] sm:$0xff] %vm431, %v416
        %450 = vst.msk [vmem:[%s172 + $0x90] sm:$0xff] %vm431, %v417
        %451 = vst.msk [vmem:[%s172 + $0x98] sm:$0xff] %vm431, %v418
        %452 = vst.msk [vmem:[%s172 + $0xa0] sm:$0xff] %vm431, %v419
        %453 = vst.msk [vmem:[%s172 + $0xa8] sm:$0xff] %vm431, %v420
        %454 = vst.msk [vmem:[%s172 + $0xb0] sm:$0xff] %vm431, %v421
        %455 = vst.msk [vmem:[%s172 + $0xb8] sm:$0xff] %vm431, %v422
        %456 = vst.msk [vmem:[%s172 + $0xc0] sm:$0xff] %vm431, %v423
        %457 = vst.msk [vmem:[%s172 + $0xc8] sm:$0xff] %vm431, %v424
        %458 = vst.msk [vmem:[%s172 + $0xd0] sm:$0xff] %vm431, %v425
        %459 = vst.msk [vmem:[%s172 + $0xd8] sm:$0xff] %vm431, %v426
        %460 = vst.msk [vmem:[%s172 + $0xe0] sm:$0xff] %vm431, %v427
        %461 = vst.msk [vmem:[%s172 + $0xe8] sm:$0xff] %vm431, %v428
        %462 = vst.msk [vmem:[%s172 + $0xf0] sm:$0xff] %vm431, %v429
        %463 = vst.msk [vmem:[%s172 + $0xf8] sm:$0xff] %vm431, %v430
        %s464 = sand.u32 %s90, 1
        %s465 = sand.u32 %s90, 1
        %s466 = smul.addr %s465, 256
        %s467 = scalar_lea.vmem [#allocation2], %s466
        // Predicated region
        $region33: #{tpu_custom_call.1} parent=31 // pred_check
          %p468 = pneg %p100
        $region34: #{tpu_custom_call.1} parent=31 // pred_check_branch
          %470 = sbr.rel (%p468) target = $region36
        $region35: #{tpu_custom_call.1} parent=31 // pred_region
          %s471 = smul.u32 32, %s14
          %s472 = ssub.s32 63, %s471
          %p473 = scmp.lt.s32.totalorder %s472, 32
          %s474 = scalar_select %p473, %s472, 32
          %s475 = smul.u32 8, %s474
          %p476 = scmp.ne.s32.totalorder 0, %s475
          %s477 = smul.addr %s471, 8
          %s478 = scalar_lea.vmem %s3, %s477
          // Predicated region
          $region37: #{tpu_custom_call.1} parent=35 // pred_check
            %p479 = pneg %p476
          $region38: #{tpu_custom_call.1} parent=35 // pred_check_branch
            %481 = sbr.rel (%p479) target = $region40
          $region39: #{tpu_custom_call.1} parent=35 // pred_region
            // Predicated region
            $region41: #{tpu_custom_call.1} parent=39 // pred_check
              _
            $region42: #{tpu_custom_call.1} parent=39 // pred_check_branch
              %483 = sbr.rel (0) target = $region44
            $region43: #{tpu_custom_call.1} parent=39 // pred_region
              // Predicated region
              $region63: #{tpu_custom_call.1} parent=43 // pred_check
                _
              $region64: #{tpu_custom_call.1} parent=43 // pred_check_branch
                %595 = sbr.rel (0) target = $region66
              $region65: #{tpu_custom_call.1} parent=43 // pred_region
                %s596 = sshrl.u32 %s474, 5
                // While loop
                $region67: #{tpu_custom_call.1} parent=65 // loop_pre_header
                  _
                $region68: #{tpu_custom_call.1} parent=65 // loop_header
                  %s598 = sphi 0, %s600
                  %p599 = scmp.ge.s32.totalorder %s598, %s596
                  %s603 = sphi 0, %s672
                  %s604 = sphi %s467, %s675
                  %s605 = sphi %s478, %s676
                $region69: #{tpu_custom_call.1} parent=65 // loop_header_branch
                  %602 = sbr.rel (%p599) target = $region73
                $region70: #{tpu_custom_call.1} parent=65 // loop_body
                  %v606 = vld [vmem:[%s604] sm:$0xff]
                  %607 = vst [vmem:[%s605] sm:$0xff] %v606
                  %v608 = vld [vmem:[%s604 + $0x8] sm:$0xff]
                  %609 = vst [vmem:[%s605 + $0x8] sm:$0xff] %v608
                  %v610 = vld [vmem:[%s604 + $0x10] sm:$0xff]
                  %611 = vst [vmem:[%s605 + $0x10] sm:$0xff] %v610
                  %v612 = vld [vmem:[%s604 + $0x18] sm:$0xff]
                  %613 = vst [vmem:[%s605 + $0x18] sm:$0xff] %v612
                  %v614 = vld [vmem:[%s604 + $0x20] sm:$0xff]
                  %615 = vst [vmem:[%s605 + $0x20] sm:$0xff] %v614
                  %v616 = vld [vmem:[%s604 + $0x28] sm:$0xff]
                  %617 = vst [vmem:[%s605 + $0x28] sm:$0xff] %v616
                  %v618 = vld [vmem:[%s604 + $0x30] sm:$0xff]
                  %619 = vst [vmem:[%s605 + $0x30] sm:$0xff] %v618
                  %v620 = vld [vmem:[%s604 + $0x38] sm:$0xff]
                  %621 = vst [vmem:[%s605 + $0x38] sm:$0xff] %v620
                  %v622 = vld [vmem:[%s604 + $0x40] sm:$0xff]
                  %623 = vst [vmem:[%s605 + $0x40] sm:$0xff] %v622
                  %v624 = vld [vmem:[%s604 + $0x48] sm:$0xff]
                  %625 = vst [vmem:[%s605 + $0x48] sm:$0xff] %v624
                  %v626 = vld [vmem:[%s604 + $0x50] sm:$0xff]
                  %627 = vst [vmem:[%s605 + $0x50] sm:$0xff] %v626
                  %v628 = vld [vmem:[%s604 + $0x58] sm:$0xff]
                  %629 = vst [vmem:[%s605 + $0x58] sm:$0xff] %v628
                  %v630 = vld [vmem:[%s604 + $0x60] sm:$0xff]
                  %631 = vst [vmem:[%s605 + $0x60] sm:$0xff] %v630
                  %v632 = vld [vmem:[%s604 + $0x68] sm:$0xff]
                  %633 = vst [vmem:[%s605 + $0x68] sm:$0xff] %v632
                  %v634 = vld [vmem:[%s604 + $0x70] sm:$0xff]
                  %635 = vst [vmem:[%s605 + $0x70] sm:$0xff] %v634
                  %v636 = vld [vmem:[%s604 + $0x78] sm:$0xff]
                  %637 = vst [vmem:[%s605 + $0x78] sm:$0xff] %v636
                  %v638 = vld [vmem:[%s604 + $0x80] sm:$0xff]
                  %639 = vst [vmem:[%s605 + $0x80] sm:$0xff] %v638
                  %v640 = vld [vmem:[%s604 + $0x88] sm:$0xff]
                  %641 = vst [vmem:[%s605 + $0x88] sm:$0xff] %v640
                  %v642 = vld [vmem:[%s604 + $0x90] sm:$0xff]
                  %643 = vst [vmem:[%s605 + $0x90] sm:$0xff] %v642
                  %v644 = vld [vmem:[%s604 + $0x98] sm:$0xff]
                  %645 = vst [vmem:[%s605 + $0x98] sm:$0xff] %v644
                  %v646 = vld [vmem:[%s604 + $0xa0] sm:$0xff]
                  %647 = vst [vmem:[%s605 + $0xa0] sm:$0xff] %v646
                  %v648 = vld [vmem:[%s604 + $0xa8] sm:$0xff]
                  %649 = vst [vmem:[%s605 + $0xa8] sm:$0xff] %v648
                  %v650 = vld [vmem:[%s604 + $0xb0] sm:$0xff]
                  %651 = vst [vmem:[%s605 + $0xb0] sm:$0xff] %v650
                  %v652 = vld [vmem:[%s604 + $0xb8] sm:$0xff]
                  %653 = vst [vmem:[%s605 + $0xb8] sm:$0xff] %v652
                  %v654 = vld [vmem:[%s604 + $0xc0] sm:$0xff]
                  %655 = vst [vmem:[%s605 + $0xc0] sm:$0xff] %v654
                  %v656 = vld [vmem:[%s604 + $0xc8] sm:$0xff]
                  %657 = vst [vmem:[%s605 + $0xc8] sm:$0xff] %v656
                  %v658 = vld [vmem:[%s604 + $0xd0] sm:$0xff]
                  %659 = vst [vmem:[%s605 + $0xd0] sm:$0xff] %v658
                  %v660 = vld [vmem:[%s604 + $0xd8] sm:$0xff]
                  %661 = vst [vmem:[%s605 + $0xd8] sm:$0xff] %v660
                  %v662 = vld [vmem:[%s604 + $0xe0] sm:$0xff]
                  %663 = vst [vmem:[%s605 + $0xe0] sm:$0xff] %v662
                  %v664 = vld [vmem:[%s604 + $0xe8] sm:$0xff]
                  %665 = vst [vmem:[%s605 + $0xe8] sm:$0xff] %v664
                  %v666 = vld [vmem:[%s604 + $0xf0] sm:$0xff]
                  %667 = vst [vmem:[%s605 + $0xf0] sm:$0xff] %v666
                  %v668 = vld [vmem:[%s604 + $0xf8] sm:$0xff]
                  %669 = vst [vmem:[%s605 + $0xf8] sm:$0xff] %v668
                  %s670 = sadd.s32 1, %s603
                  %p671 = scmp.ge.s32.totalorder %s670, %s596
                  %s672 = scalar_select %p671, 0, %s670
                  %s673 = smul.u32 %s672, 256
                  %s674 = smul.u32 %s672, 256
                  %s675 = scalar_lea.vmem %s467, %s673 [#allocation2]
                  %s676 = scalar_lea.vmem %s478, %s674
                $region71: #{tpu_custom_call.1} parent=65 // loop_footer
                  %s600 = sadd.s32 %s598, 1
                $region72: #{tpu_custom_call.1} parent=65 // loop_footer_branch
                  %597 = sbr.rel target = $region68
                $region73: #{tpu_custom_call.1} parent=65 // loop_exit
                  _
                %s677 = sshrl.u32 %s474, 5
                %s678 = sand.u32 %s474, 31
                %s679 = smul.u32 %s677, 32
                %s680 = smul.u32 8, %s679
                %s681 = scalar_lea.vmem %s467, %s680 [#allocation2]
                %s682 = smul.u32 8, %s679
                %s683 = scalar_lea.vmem %s478, %s682
                // While loop
                $region74: #{tpu_custom_call.1} parent=65 // loop_pre_header
                  _
                $region75: #{tpu_custom_call.1} parent=65 // loop_header
                  %s685 = sphi 0, %s687
                  %p686 = scmp.ge.s32.totalorder %s685, %s678
                  %s690 = sphi 0, %s697
                  %s691 = sphi %s681, %s700
                  %s692 = sphi %s683, %s701
                $region76: #{tpu_custom_call.1} parent=65 // loop_header_branch
                  %689 = sbr.rel (%p686) target = $region80
                $region77: #{tpu_custom_call.1} parent=65 // loop_body
                  %v693 = vld [vmem:[%s691] sm:$0xff]
                  %694 = vst [vmem:[%s692] sm:$0xff] %v693
                  %s695 = sadd.s32 1, %s690
                  %p696 = scmp.ge.s32.totalorder %s695, %s678
                  %s697 = scalar_select %p696, 0, %s695
                  %s698 = smul.u32 %s697, 8
                  %s699 = smul.u32 %s697, 8
                  %s700 = scalar_lea.vmem %s681, %s698 [#allocation2]
                  %s701 = scalar_lea.vmem %s683, %s699
                $region78: #{tpu_custom_call.1} parent=65 // loop_footer
                  %s687 = sadd.s32 %s685, 1
                $region79: #{tpu_custom_call.1} parent=65 // loop_footer_branch
                  %684 = sbr.rel target = $region75
                $region80: #{tpu_custom_call.1} parent=65 // loop_exit
                  _
              $region66: #{tpu_custom_call.1} parent=43 // pred_fallthru
                _
              // Predicated region
              $region81: #{tpu_custom_call.1} parent=43 // pred_check
                _
              $region82: #{tpu_custom_call.1} parent=43 // pred_check_branch
                %703 = sbr.rel target = $region84
              $region83: #{tpu_custom_call.1} parent=43 // pred_region
                _
              $region84: #{tpu_custom_call.1} parent=43 // pred_fallthru
                _
            $region44: #{tpu_custom_call.1} parent=39 // pred_fallthru
              _
            // Predicated region
            $region45: #{tpu_custom_call.1} parent=39 // pred_check
              _
            $region46: #{tpu_custom_call.1} parent=39 // pred_check_branch
              %485 = sbr.rel target = $region48
            $region47: #{tpu_custom_call.1} parent=39 // pred_region
              %s487 = ssub.s32 256, 1
              %s488 = sshrl.u32 %s474, 5
              // While loop
              $region49: #{tpu_custom_call.1} parent=47 // loop_pre_header
                _
              $region50: #{tpu_custom_call.1} parent=47 // loop_header
                %s490 = sphi 0, %s492
                %p491 = scmp.ge.s32.totalorder %s490, %s488
                %s495 = sphi 0, %s564
                %s496 = sphi %s467, %s567
                %s497 = sphi %s478, %s568
              $region51: #{tpu_custom_call.1} parent=47 // loop_header_branch
                %494 = sbr.rel (%p491) target = $region55
              $region52: #{tpu_custom_call.1} parent=47 // loop_body
                %v498 = vld [vmem:[%s496] sm:%s487]
                %499 = vst [vmem:[%s497] sm:%s487] %v498
                %v500 = vld [vmem:[%s496 + $0x8] sm:%s487]
                %501 = vst [vmem:[%s497 + $0x8] sm:%s487] %v500
                %v502 = vld [vmem:[%s496 + $0x10] sm:%s487]
                %503 = vst [vmem:[%s497 + $0x10] sm:%s487] %v502
                %v504 = vld [vmem:[%s496 + $0x18] sm:%s487]
                %505 = vst [vmem:[%s497 + $0x18] sm:%s487] %v504
                %v506 = vld [vmem:[%s496 + $0x20] sm:%s487]
                %507 = vst [vmem:[%s497 + $0x20] sm:%s487] %v506
                %v508 = vld [vmem:[%s496 + $0x28] sm:%s487]
                %509 = vst [vmem:[%s497 + $0x28] sm:%s487] %v508
                %v510 = vld [vmem:[%s496 + $0x30] sm:%s487]
                %511 = vst [vmem:[%s497 + $0x30] sm:%s487] %v510
                %v512 = vld [vmem:[%s496 + $0x38] sm:%s487]
                %513 = vst [vmem:[%s497 + $0x38] sm:%s487] %v512
                %v514 = vld [vmem:[%s496 + $0x40] sm:%s487]
                %515 = vst [vmem:[%s497 + $0x40] sm:%s487] %v514
                %v516 = vld [vmem:[%s496 + $0x48] sm:%s487]
                %517 = vst [vmem:[%s497 + $0x48] sm:%s487] %v516
                %v518 = vld [vmem:[%s496 + $0x50] sm:%s487]
                %519 = vst [vmem:[%s497 + $0x50] sm:%s487] %v518
                %v520 = vld [vmem:[%s496 + $0x58] sm:%s487]
                %521 = vst [vmem:[%s497 + $0x58] sm:%s487] %v520
                %v522 = vld [vmem:[%s496 + $0x60] sm:%s487]
                %523 = vst [vmem:[%s497 + $0x60] sm:%s487] %v522
                %v524 = vld [vmem:[%s496 + $0x68] sm:%s487]
                %525 = vst [vmem:[%s497 + $0x68] sm:%s487] %v524
                %v526 = vld [vmem:[%s496 + $0x70] sm:%s487]
                %527 = vst [vmem:[%s497 + $0x70] sm:%s487] %v526
                %v528 = vld [vmem:[%s496 + $0x78] sm:%s487]
                %529 = vst [vmem:[%s497 + $0x78] sm:%s487] %v528
                %v530 = vld [vmem:[%s496 + $0x80] sm:%s487]
                %531 = vst [vmem:[%s497 + $0x80] sm:%s487] %v530
                %v532 = vld [vmem:[%s496 + $0x88] sm:%s487]
                %533 = vst [vmem:[%s497 + $0x88] sm:%s487] %v532
                %v534 = vld [vmem:[%s496 + $0x90] sm:%s487]
                %535 = vst [vmem:[%s497 + $0x90] sm:%s487] %v534
                %v536 = vld [vmem:[%s496 + $0x98] sm:%s487]
                %537 = vst [vmem:[%s497 + $0x98] sm:%s487] %v536
                %v538 = vld [vmem:[%s496 + $0xa0] sm:%s487]
                %539 = vst [vmem:[%s497 + $0xa0] sm:%s487] %v538
                %v540 = vld [vmem:[%s496 + $0xa8] sm:%s487]
                %541 = vst [vmem:[%s497 + $0xa8] sm:%s487] %v540
                %v542 = vld [vmem:[%s496 + $0xb0] sm:%s487]
                %543 = vst [vmem:[%s497 + $0xb0] sm:%s487] %v542
                %v544 = vld [vmem:[%s496 + $0xb8] sm:%s487]
                %545 = vst [vmem:[%s497 + $0xb8] sm:%s487] %v544
                %v546 = vld [vmem:[%s496 + $0xc0] sm:%s487]
                %547 = vst [vmem:[%s497 + $0xc0] sm:%s487] %v546
                %v548 = vld [vmem:[%s496 + $0xc8] sm:%s487]
                %549 = vst [vmem:[%s497 + $0xc8] sm:%s487] %v548
                %v550 = vld [vmem:[%s496 + $0xd0] sm:%s487]
                %551 = vst [vmem:[%s497 + $0xd0] sm:%s487] %v550
                %v552 = vld [vmem:[%s496 + $0xd8] sm:%s487]
                %553 = vst [vmem:[%s497 + $0xd8] sm:%s487] %v552
                %v554 = vld [vmem:[%s496 + $0xe0] sm:%s487]
                %555 = vst [vmem:[%s497 + $0xe0] sm:%s487] %v554
                %v556 = vld [vmem:[%s496 + $0xe8] sm:%s487]
                %557 = vst [vmem:[%s497 + $0xe8] sm:%s487] %v556
                %v558 = vld [vmem:[%s496 + $0xf0] sm:%s487]
                %559 = vst [vmem:[%s497 + $0xf0] sm:%s487] %v558
                %v560 = vld [vmem:[%s496 + $0xf8] sm:%s487]
                %561 = vst [vmem:[%s497 + $0xf8] sm:%s487] %v560
                %s562 = sadd.s32 1, %s495
                %p563 = scmp.ge.s32.totalorder %s562, %s488
                %s564 = scalar_select %p563, 0, %s562
                %s565 = smul.u32 %s564, 256
                %s566 = smul.u32 %s564, 256
                %s567 = scalar_lea.vmem %s467, %s565 [#allocation2]
                %s568 = scalar_lea.vmem %s478, %s566
              $region53: #{tpu_custom_call.1} parent=47 // loop_footer
                %s492 = sadd.s32 %s490, 1
              $region54: #{tpu_custom_call.1} parent=47 // loop_footer_branch
                %489 = sbr.rel target = $region50
              $region55: #{tpu_custom_call.1} parent=47 // loop_exit
                _
              %s569 = sshrl.u32 %s474, 5
              %s570 = sand.u32 %s474, 31
              %s571 = smul.u32 %s569, 32
              %s572 = smul.u32 8, %s571
              %s573 = scalar_lea.vmem %s467, %s572 [#allocation2]
              %s574 = smul.u32 8, %s571
              %s575 = scalar_lea.vmem %s478, %s574
              // While loop
              $region56: #{tpu_custom_call.1} parent=47 // loop_pre_header
                _
              $region57: #{tpu_custom_call.1} parent=47 // loop_header
                %s577 = sphi 0, %s579
                %p578 = scmp.ge.s32.totalorder %s577, %s570
                %s582 = sphi 0, %s589
                %s583 = sphi %s573, %s592
                %s584 = sphi %s575, %s593
              $region58: #{tpu_custom_call.1} parent=47 // loop_header_branch
                %581 = sbr.rel (%p578) target = $region62
              $region59: #{tpu_custom_call.1} parent=47 // loop_body
                %v585 = vld [vmem:[%s583] sm:%s487]
                %586 = vst [vmem:[%s584] sm:%s487] %v585
                %s587 = sadd.s32 1, %s582
                %p588 = scmp.ge.s32.totalorder %s587, %s570
                %s589 = scalar_select %p588, 0, %s587
                %s590 = smul.u32 %s589, 8
                %s591 = smul.u32 %s589, 8
                %s592 = scalar_lea.vmem %s573, %s590 [#allocation2]
                %s593 = scalar_lea.vmem %s575, %s591
              $region60: #{tpu_custom_call.1} parent=47 // loop_footer
                %s579 = sadd.s32 %s577, 1
              $region61: #{tpu_custom_call.1} parent=47 // loop_footer_branch
                %576 = sbr.rel target = $region57
              $region62: #{tpu_custom_call.1} parent=47 // loop_exit
                _
            $region48: #{tpu_custom_call.1} parent=39 // pred_fallthru
              _
          $region40: #{tpu_custom_call.1} parent=35 // pred_fallthru
            _
          %704 = vnop
        $region36: #{tpu_custom_call.1} parent=31 // pred_fallthru
          _
      $region32: #{tpu_custom_call.1} parent=5 // pred_fallthru
        _
      %p705 = scmp.le.s32.totalorder 2, %s9
      // Predicated region
      $region85: #{tpu_custom_call.1} parent=5 // pred_check
        %p706 = pneg %p705
      $region86: #{tpu_custom_call.1} parent=5 // pred_check_branch
        %708 = sbr.rel (%p706) target = $region88
      $region87: #{tpu_custom_call.1} parent=5 // pred_region
        %s709 = ssub.s32 %s9, 2
        // Predicated region
        $region89: #{tpu_custom_call.1} parent=87 // pred_check
          %p710 = pneg %p106
        $region90: #{tpu_custom_call.1} parent=87 // pred_check_branch
          %712 = sbr.rel (%p710) target = $region92
        $region91: #{tpu_custom_call.1} parent=87 // pred_region
          %s713 = sand.u32 %s91, 1
          %s714 = sand.u32 %s91, 1
          %s715 = smul.addr %s714, 256
          %s716 = scalar_lea.vmem [#allocation2], %s715
        $region92: #{tpu_custom_call.1} parent=87 // pred_fallthru
          _
      $region88: #{tpu_custom_call.1} parent=5 // pred_fallthru
        _
    $region6: #{tpu_custom_call.1} parent=1 // loop_footer
      %s13 = sadd.s32 1, %s9
    $region7: #{tpu_custom_call.1} parent=1 // loop_footer_branch
      %8 = sbr.rel target = $region3
    $region8: #{tpu_custom_call.1} parent=1 // loop_exit
      _

</llo_original>
